<compile_context>
chip_gen: v7x
topology: tpu7x:2x2x1
jax: 0.10.0
libtpu: 0.0.40
codegen_flags: <defaults>
</compile_context>

<pallas_src>
import jax
import jax.numpy as jnp
from jax.experimental import pallas as pl
from jax.experimental.pallas import tpu as pltpu

BN_EPS = 1e-5


def hmcn_kernel(x_ref, w1_ref, w2_ref, w3_ref, w4_ref, g_ref, b_ref, bl_ref, o_ref):
    """Fused HMCN forward.

    x_ref:  (N, C_in)         input (L=1 squeezed)
    w1_ref: (C_in, 8*C)       [wf0 | wf1 | wf2 | wf3 | linear] fused first-layer slab
    w2_ref: (3*C, 3*C)        blockdiag(wr_b1.1, wr_b2.1, wr_b3.1)
    w3_ref: (2*C, 2*C)        blockdiag(wr_b2.2, wr_b3.2)
    w4_ref: (C, C)            wr_b3.3
    g_ref:  (1, 10*C)         BN gammas, layer-major order [L1(4C) | L2(3C) | L3(2C) | L4(C)]
    b_ref:  (1, 10*C)         BN betas, same order
    bl_ref: (1, 4*C)          linear bias
    o_ref:  (N, 4*C)          output
    """
    C = o_ref.shape[1] // 4
    N = x_ref.shape[0]
    inv_n = 1.0 / N

    x = x_ref[...]
    g = g_ref[...]
    b = b_ref[...]

    def bn_relu(y, gg, bb):
        # Single-pass batch stats (training-mode BatchNorm1d, biased variance),
        # folded into one scale/shift; rsqrt runs on the EUP slot.
        s1 = jnp.sum(y, axis=0, keepdims=True)
        s2 = jnp.sum(y * y, axis=0, keepdims=True)
        mu = s1 * inv_n
        var = s2 * inv_n - mu * mu
        scale = gg * jax.lax.rsqrt(var + BN_EPS)
        shift = bb - mu * scale
        # ReLU; dropout is identity (see TODO at top of file).
        return jnp.maximum(y * scale + shift, 0.0)

    # ---- Layer 1: all four first convs + residual Linear in ONE MXU pass ----
    y1 = jnp.dot(x, w1_ref[...], preferred_element_type=jnp.float32)      # (N, 8C)
    z = y1[:, 4 * C:] + bl_ref[...]                                       # residual path (N, 4C)
    p1 = bn_relu(y1[:, :4 * C], g[:, :4 * C], b[:, :4 * C])               # [h0 | h1a | h2a | h3a]

    # ---- Layer 2: second conv of branches 1..3 (block-diagonal weight) ----
    y2 = jnp.dot(p1[:, C:], w2_ref[...], preferred_element_type=jnp.float32)  # (N, 3C)
    p2 = bn_relu(y2, g[:, 4 * C:7 * C], b[:, 4 * C:7 * C])                # [h1 | h2b | h3b]

    # ---- Layer 3: third conv of branches 2..3 ----
    y3 = jnp.dot(p2[:, C:], w3_ref[...], preferred_element_type=jnp.float32)  # (N, 2C)
    p3 = bn_relu(y3, g[:, 7 * C:9 * C], b[:, 7 * C:9 * C])                # [h2 | h3c]

    # ---- Layer 4: fourth conv of branch 3 ----
    y4 = jnp.dot(p3[:, C:], w4_ref[...], preferred_element_type=jnp.float32)  # (N, C)
    p4 = bn_relu(y4, g[:, 9 * C:], b[:, 9 * C:])                          # [h3]

    # ---- Output: each branch already sits in lanes [0:C) of its layer result; ----
    # ---- add into the matching lane range of o_ref (no in-kernel concatenate). ----
    o_ref[:, 0:C] = z[:, 0:C] + p1[:, 0:C]
    o_ref[:, C:2 * C] = z[:, C:2 * C] + p2[:, 0:C]
    o_ref[:, 2 * C:3 * C] = z[:, 2 * C:3 * C] + p3[:, 0:C]
    o_ref[:, 3 * C:4 * C] = z[:, 3 * C:4 * C] + p4


def hmcn_forward(x_ncl, fused_params):
    """x_ncl: (N, C_in, 1) float32 -> (N, 4*C_out, 1) float32."""
    N, C_in, L = x_ncl.shape
    assert L == 1, "HMCN forward is only well-defined for L == 1"
    w1, w2, w3, w4, g_all, b_all, bl = fused_params
    C_out = bl.shape[-1] // 4

    x2d = x_ncl[:, :, 0]                                      # (N, C_in)

    vmem = pl.BlockSpec(memory_space=pltpu.MemorySpace.VMEM)
    out2d = pl.pallas_call(
        hmcn_kernel,
        out_shape=jax.ShapeDtypeStruct((N, 4 * C_out), jnp.float32),
        in_specs=[vmem] * 8,
        out_specs=vmem,
        compiler_params=pltpu.CompilerParams(vmem_limit_bytes=32 * 1024 * 1024),
    )(x2d, w1, w2, w3, w4, g_all, b_all, bl)

    return out2d[:, :, None]                                  # (N, 4*C_out, 1)


# ----------------------------------------------------------------------------------
# Host-side parameter packing (done once, outside the kernel).
# ----------------------------------------------------------------------------------
def _block_diag(*mats):
    rows = sum(m.shape[0] for m in mats)
    cols = sum(m.shape[1] for m in mats)
    out = jnp.zeros((rows, cols), mats[0].dtype)
    r = c = 0
    for m in mats:
        out = out.at[r:r + m.shape[0], c:c + m.shape[1]].set(m)
        r += m.shape[0]
        c += m.shape[1]
    return out


def fuse_params(wf, wr, gamma, beta, wl, bl):
    """Raw per-block params -> fused layer-wise slabs consumed by the kernel.

    wf: (4, C_in, C)  first conv (center tap) of each branch
    wr: (6, C, C)     remaining convs, order [b1.1, b2.1, b2.2, b3.1, b3.2, b3.3]
    gamma/beta: (10, C), BN block order [b0.0, b1.0, b1.1, b2.0, b2.1, b2.2, b3.0, b3.1, b3.2, b3.3]
    wl: (C_in, 4C), bl: (1, 4C)
    """
    # Layer 1: [branch0 | branch1 | branch2 | branch3 | linear]
    w1 = jnp.concatenate([wf[0], wf[1], wf[2], wf[3], wl], axis=1)        # (C_in, 8C)
    # Layer 2: second conv of branches 1..3  (wr indices 0, 1, 3)
    w2 = _block_diag(wr[0], wr[1], wr[3])                                 # (3C, 3C)
    # Layer 3: third conv of branches 2..3   (wr indices 2, 4)
    w3 = _block_diag(wr[2], wr[4])                                        # (2C, 2C)
    # Layer 4: fourth conv of branch 3       (wr index 5)
    w4 = wr[5]                                                            # (C, C)

    # BN params in layer-major lane order: L1=[b0.0,b1.0,b2.0,b3.0], L2=[b1.1,b2.1,b3.1],
    # L3=[b2.2,b3.2], L4=[b3.3]  -> (1, 10C) each.
    order = jnp.array([0, 1, 3, 6, 2, 4, 7, 5, 8, 9], jnp.int32)
    g_all = gamma[order].reshape(1, -1)
    b_all = beta[order].reshape(1, -1)

    return w1, w2, w3, w4, g_all, b_all, bl


def make_params(key, c_in, c_out):
    """Deterministic parameter init (shapes match the PyTorch module)."""
    ks = jax.random.split(key, 12)
    scale = 0.1

    # Full PyTorch conv weight tensors (C_out, C_in, k); only the center tap matters at L=1.
    def center(w):  # (C_out, C_in, k) -> (C_in, C_out)
        return jnp.transpose(w[:, :, w.shape[-1] // 2], (1, 0))

    first_ks = [1, 1, 1, 1]                                   # first conv of each branch
    rest_specs = [3, 5, 5, 7, 7, 7]                           # remaining convs (branch order)

    wf = jnp.stack([
        center(scale * jax.random.normal(ks[i], (c_out, c_in, k), jnp.float32))
        for i, k in enumerate(first_ks)
    ])                                                        # (4, C_in, C_out)
    wr = jnp.stack([
        center(scale * jax.random.normal(ks[4 + i], (c_out, c_out, k), jnp.float32))
        for i, k in enumerate(rest_specs)
    ])                                                        # (6, C_out, C_out)

    # BatchNorm params: PyTorch default init weight=1, bias=0 (10 BN layers).
    gamma = jnp.ones((10, c_out), jnp.float32)
    beta = jnp.zeros((10, c_out), jnp.float32)

    # Linear(in_channel, 4*out_channel): store as (C_in, 4*C_out) + (1, 4*C_out).
    wl = scale * jax.random.normal(ks[10], (c_in, 4 * c_out), jnp.float32)
    bl = scale * jax.random.normal(ks[11], (1, 4 * c_out), jnp.float32)

    return wf, wr, gamma, beta, wl, bl


def hmcn_reference(x_ncl, raw_params):
    """Pure-JAX reference with identical semantics (unfused, two-pass BN)."""
    wf, wr, gamma, beta, wl, bl = raw_params
    x = x_ncl[:, :, 0]

    def blk(h, w, i):
        y = h @ w
        mu = jnp.mean(y, axis=0, keepdims=True)
        var = jnp.mean((y - mu) ** 2, axis=0, keepdims=True)
        y = (y - mu) / jnp.sqrt(var + BN_EPS) * gamma[i][None, :] + beta[i][None, :]
        return jnp.maximum(y, 0.0)

    h0 = blk(x, wf[0], 0)
    h1 = blk(blk(x, wf[1], 1), wr[0], 2)
    h2 = blk(blk(blk(x, wf[2], 3), wr[1], 4), wr[2], 5)
    h3 = blk(blk(blk(blk(x, wf[3], 6), wr[3], 7), wr[4], 8), wr[5], 9)
    x4 = jnp.concatenate([h0, h1, h2, h3], axis=1)
    z = x @ wl + bl
    return (z + x4)[:, :, None]


if __name__ == "__main__":
    N, C_IN, C_OUT, L = 8, 16, 32, 1

    key = jax.random.PRNGKey(0)
    kx, kp = jax.random.split(key)
    x = jax.random.normal(kx, (N, C_IN, L), jnp.float32)      # PyTorch NCL input, L=1
    raw = make_params(kp, C_IN, C_OUT)
    fused = fuse_params(*raw)

    out = jax.block_until_ready(hmcn_forward(x, fused))
    ref = jax.block_until_ready(hmcn_reference(x, raw))

    assert out.shape == (N, 4 * C_OUT, 1), out.shape
    if not jnp.allclose(out, ref, atol=1e-4, rtol=1e-4):
        raise AssertionError("Pallas kernel does not match reference")
    print("KERNEL_OK")
</pallas_src>

<mosaic_0001>
module attributes {stable_mosaic.version = 11 : i64} {
  func.func @hmcn_kernel(%arg0: memref<8x16xf32, #tpu.memory_space<vmem>>, %arg1: memref<16x256xf32, #tpu.memory_space<vmem>>, %arg2: memref<96x96xf32, #tpu.memory_space<vmem>>, %arg3: memref<64x64xf32, #tpu.memory_space<vmem>>, %arg4: memref<32x32xf32, #tpu.memory_space<vmem>>, %arg5: memref<1x320xf32, #tpu.memory_space<vmem>>, %arg6: memref<1x320xf32, #tpu.memory_space<vmem>>, %arg7: memref<1x128xf32, #tpu.memory_space<vmem>>, %arg8: memref<8x128xf32, #tpu.memory_space<vmem>>) attributes {dimension_semantics = [], scalar_prefetch = 0 : i64, scratch_operands = 0 : i64, tpu.core_type = #tpu.core_type<tc>} {
    %c0 = arith.constant 0 : index
    %c0_0 = arith.constant 0 : index
    %0 = vector.load %arg0[%c0, %c0_0] : memref<8x16xf32, #tpu.memory_space<vmem>>, vector<8x16xf32>
    %c0_1 = arith.constant 0 : index
    %c0_2 = arith.constant 0 : index
    %1 = vector.load %arg5[%c0_1, %c0_2] : memref<1x320xf32, #tpu.memory_space<vmem>>, vector<1x320xf32>
    %c0_3 = arith.constant 0 : index
    %c0_4 = arith.constant 0 : index
    %2 = vector.load %arg6[%c0_3, %c0_4] : memref<1x320xf32, #tpu.memory_space<vmem>>, vector<1x320xf32>
    %c0_5 = arith.constant 0 : index
    %c0_6 = arith.constant 0 : index
    %3 = vector.load %arg1[%c0_5, %c0_6] : memref<16x256xf32, #tpu.memory_space<vmem>>, vector<16x256xf32>
    %cst = arith.constant dense<0.000000e+00> : vector<8x256xf32>
    %4 = tpu.matmul %0, %3, %cst {dimension_numbers = #tpu.dot_dimension_numbers<[1], [0], [0], [1], [0, 0, 1, 1], [], []>} : vector<8x16xf32>, vector<16x256xf32>, vector<8x256xf32> -> vector<8x256xf32>
    %5 = vector.extract_strided_slice %4 {offsets = [0, 128], sizes = [8, 128], strides = [1, 1]} : vector<8x256xf32> to vector<8x128xf32>
    %c0_7 = arith.constant 0 : index
    %c0_8 = arith.constant 0 : index
    %6 = vector.load %arg7[%c0_7, %c0_8] : memref<1x128xf32, #tpu.memory_space<vmem>>, vector<1x128xf32>
    %7 = vector.broadcast %6 : vector<1x128xf32> to vector<8x128xf32>
    %8 = arith.addf %5, %7 : vector<8x128xf32>
    %9 = vector.extract_strided_slice %4 {offsets = [0, 0], sizes = [8, 128], strides = [1, 1]} : vector<8x256xf32> to vector<8x128xf32>
    %10 = vector.extract_strided_slice %1 {offsets = [0, 0], sizes = [1, 128], strides = [1, 1]} : vector<1x320xf32> to vector<1x128xf32>
    %11 = vector.extract_strided_slice %2 {offsets = [0, 0], sizes = [1, 128], strides = [1, 1]} : vector<1x320xf32> to vector<1x128xf32>
    %cst_9 = arith.constant dense<0.000000e+00> : vector<128xf32>
    %12 = vector.multi_reduction <add>, %9, %cst_9 [0] : vector<8x128xf32> to vector<128xf32>
    %13 = vector.shape_cast %12 : vector<128xf32> to vector<1x128xf32>
    %14 = arith.mulf %9, %9 : vector<8x128xf32>
    %cst_10 = arith.constant dense<0.000000e+00> : vector<128xf32>
    %15 = vector.multi_reduction <add>, %14, %cst_10 [0] : vector<8x128xf32> to vector<128xf32>
    %16 = vector.shape_cast %15 : vector<128xf32> to vector<1x128xf32>
    %cst_11 = arith.constant 1.250000e-01 : f32
    %17 = vector.broadcast %cst_11 : f32 to vector<1x128xf32>
    %18 = arith.mulf %13, %17 : vector<1x128xf32>
    %cst_12 = arith.constant 1.250000e-01 : f32
    %19 = vector.broadcast %cst_12 : f32 to vector<1x128xf32>
    %20 = arith.mulf %16, %19 : vector<1x128xf32>
    %21 = arith.mulf %18, %18 : vector<1x128xf32>
    %22 = arith.subf %20, %21 : vector<1x128xf32>
    %cst_13 = arith.constant 9.99999974E-6 : f32
    %23 = vector.broadcast %cst_13 : f32 to vector<1x128xf32>
    %24 = arith.addf %22, %23 : vector<1x128xf32>
    %25 = math.rsqrt %24 : vector<1x128xf32>
    %26 = arith.mulf %10, %25 : vector<1x128xf32>
    %27 = arith.mulf %18, %26 : vector<1x128xf32>
    %28 = arith.subf %11, %27 : vector<1x128xf32>
    %29 = vector.broadcast %26 : vector<1x128xf32> to vector<8x128xf32>
    %30 = arith.mulf %9, %29 : vector<8x128xf32>
    %31 = vector.broadcast %28 : vector<1x128xf32> to vector<8x128xf32>
    %32 = arith.addf %30, %31 : vector<8x128xf32>
    %cst_14 = arith.constant 0.000000e+00 : f32
    %33 = vector.broadcast %cst_14 : f32 to vector<8x128xf32>
    %34 = arith.maximumf %32, %33 : vector<8x128xf32>
    %35 = vector.extract_strided_slice %34 {offsets = [0, 32], sizes = [8, 96], strides = [1, 1]} : vector<8x128xf32> to vector<8x96xf32>
    %c0_15 = arith.constant 0 : index
    %c0_16 = arith.constant 0 : index
    %36 = vector.load %arg2[%c0_15, %c0_16] : memref<96x96xf32, #tpu.memory_space<vmem>>, vector<96x96xf32>
    %cst_17 = arith.constant dense<0.000000e+00> : vector<8x96xf32>
    %37 = tpu.matmul %35, %36, %cst_17 {dimension_numbers = #tpu.dot_dimension_numbers<[1], [0], [0], [1], [0, 0, 1, 1], [], []>} : vector<8x96xf32>, vector<96x96xf32>, vector<8x96xf32> -> vector<8x96xf32>
    %38 = vector.extract_strided_slice %1 {offsets = [0, 128], sizes = [1, 96], strides = [1, 1]} : vector<1x320xf32> to vector<1x96xf32>
    %39 = vector.extract_strided_slice %2 {offsets = [0, 128], sizes = [1, 96], strides = [1, 1]} : vector<1x320xf32> to vector<1x96xf32>
    %cst_18 = arith.constant dense<0.000000e+00> : vector<96xf32>
    %40 = vector.multi_reduction <add>, %37, %cst_18 [0] : vector<8x96xf32> to vector<96xf32>
    %41 = vector.shape_cast %40 : vector<96xf32> to vector<1x96xf32>
    %42 = arith.mulf %37, %37 : vector<8x96xf32>
    %cst_19 = arith.constant dense<0.000000e+00> : vector<96xf32>
    %43 = vector.multi_reduction <add>, %42, %cst_19 [0] : vector<8x96xf32> to vector<96xf32>
    %44 = vector.shape_cast %43 : vector<96xf32> to vector<1x96xf32>
    %cst_20 = arith.constant 1.250000e-01 : f32
    %45 = vector.broadcast %cst_20 : f32 to vector<1x96xf32>
    %46 = arith.mulf %41, %45 : vector<1x96xf32>
    %cst_21 = arith.constant 1.250000e-01 : f32
    %47 = vector.broadcast %cst_21 : f32 to vector<1x96xf32>
    %48 = arith.mulf %44, %47 : vector<1x96xf32>
    %49 = arith.mulf %46, %46 : vector<1x96xf32>
    %50 = arith.subf %48, %49 : vector<1x96xf32>
    %cst_22 = arith.constant 9.99999974E-6 : f32
    %51 = vector.broadcast %cst_22 : f32 to vector<1x96xf32>
    %52 = arith.addf %50, %51 : vector<1x96xf32>
    %53 = math.rsqrt %52 : vector<1x96xf32>
    %54 = arith.mulf %38, %53 : vector<1x96xf32>
    %55 = arith.mulf %46, %54 : vector<1x96xf32>
    %56 = arith.subf %39, %55 : vector<1x96xf32>
    %57 = vector.broadcast %54 : vector<1x96xf32> to vector<8x96xf32>
    %58 = arith.mulf %37, %57 : vector<8x96xf32>
    %59 = vector.broadcast %56 : vector<1x96xf32> to vector<8x96xf32>
    %60 = arith.addf %58, %59 : vector<8x96xf32>
    %cst_23 = arith.constant 0.000000e+00 : f32
    %61 = vector.broadcast %cst_23 : f32 to vector<8x96xf32>
    %62 = arith.maximumf %60, %61 : vector<8x96xf32>
    %63 = vector.extract_strided_slice %62 {offsets = [0, 32], sizes = [8, 64], strides = [1, 1]} : vector<8x96xf32> to vector<8x64xf32>
    %c0_24 = arith.constant 0 : index
    %c0_25 = arith.constant 0 : index
    %64 = vector.load %arg3[%c0_24, %c0_25] : memref<64x64xf32, #tpu.memory_space<vmem>>, vector<64x64xf32>
    %cst_26 = arith.constant dense<0.000000e+00> : vector<8x64xf32>
    %65 = tpu.matmul %63, %64, %cst_26 {dimension_numbers = #tpu.dot_dimension_numbers<[1], [0], [0], [1], [0, 0, 1, 1], [], []>} : vector<8x64xf32>, vector<64x64xf32>, vector<8x64xf32> -> vector<8x64xf32>
    %66 = vector.extract_strided_slice %1 {offsets = [0, 224], sizes = [1, 64], strides = [1, 1]} : vector<1x320xf32> to vector<1x64xf32>
    %67 = vector.extract_strided_slice %2 {offsets = [0, 224], sizes = [1, 64], strides = [1, 1]} : vector<1x320xf32> to vector<1x64xf32>
    %cst_27 = arith.constant dense<0.000000e+00> : vector<64xf32>
    %68 = vector.multi_reduction <add>, %65, %cst_27 [0] : vector<8x64xf32> to vector<64xf32>
    %69 = vector.shape_cast %68 : vector<64xf32> to vector<1x64xf32>
    %70 = arith.mulf %65, %65 : vector<8x64xf32>
    %cst_28 = arith.constant dense<0.000000e+00> : vector<64xf32>
    %71 = vector.multi_reduction <add>, %70, %cst_28 [0] : vector<8x64xf32> to vector<64xf32>
    %72 = vector.shape_cast %71 : vector<64xf32> to vector<1x64xf32>
    %cst_29 = arith.constant 1.250000e-01 : f32
    %73 = vector.broadcast %cst_29 : f32 to vector<1x64xf32>
    %74 = arith.mulf %69, %73 : vector<1x64xf32>
    %cst_30 = arith.constant 1.250000e-01 : f32
    %75 = vector.broadcast %cst_30 : f32 to vector<1x64xf32>
    %76 = arith.mulf %72, %75 : vector<1x64xf32>
    %77 = arith.mulf %74, %74 : vector<1x64xf32>
    %78 = arith.subf %76, %77 : vector<1x64xf32>
    %cst_31 = arith.constant 9.99999974E-6 : f32
    %79 = vector.broadcast %cst_31 : f32 to vector<1x64xf32>
    %80 = arith.addf %78, %79 : vector<1x64xf32>
    %81 = math.rsqrt %80 : vector<1x64xf32>
    %82 = arith.mulf %66, %81 : vector<1x64xf32>
    %83 = arith.mulf %74, %82 : vector<1x64xf32>
    %84 = arith.subf %67, %83 : vector<1x64xf32>
    %85 = vector.broadcast %82 : vector<1x64xf32> to vector<8x64xf32>
    %86 = arith.mulf %65, %85 : vector<8x64xf32>
    %87 = vector.broadcast %84 : vector<1x64xf32> to vector<8x64xf32>
    %88 = arith.addf %86, %87 : vector<8x64xf32>
    %cst_32 = arith.constant 0.000000e+00 : f32
    %89 = vector.broadcast %cst_32 : f32 to vector<8x64xf32>
    %90 = arith.maximumf %88, %89 : vector<8x64xf32>
    %91 = vector.extract_strided_slice %90 {offsets = [0, 32], sizes = [8, 32], strides = [1, 1]} : vector<8x64xf32> to vector<8x32xf32>
    %c0_33 = arith.constant 0 : index
    %c0_34 = arith.constant 0 : index
    %92 = vector.load %arg4[%c0_33, %c0_34] : memref<32x32xf32, #tpu.memory_space<vmem>>, vector<32x32xf32>
    %cst_35 = arith.constant dense<0.000000e+00> : vector<8x32xf32>
    %93 = tpu.matmul %91, %92, %cst_35 {dimension_numbers = #tpu.dot_dimension_numbers<[1], [0], [0], [1], [0, 0, 1, 1], [], []>} : vector<8x32xf32>, vector<32x32xf32>, vector<8x32xf32> -> vector<8x32xf32>
    %94 = vector.extract_strided_slice %1 {offsets = [0, 288], sizes = [1, 32], strides = [1, 1]} : vector<1x320xf32> to vector<1x32xf32>
    %95 = vector.extract_strided_slice %2 {offsets = [0, 288], sizes = [1, 32], strides = [1, 1]} : vector<1x320xf32> to vector<1x32xf32>
    %cst_36 = arith.constant dense<0.000000e+00> : vector<32xf32>
    %96 = vector.multi_reduction <add>, %93, %cst_36 [0] : vector<8x32xf32> to vector<32xf32>
    %97 = vector.shape_cast %96 : vector<32xf32> to vector<1x32xf32>
    %98 = arith.mulf %93, %93 : vector<8x32xf32>
    %cst_37 = arith.constant dense<0.000000e+00> : vector<32xf32>
    %99 = vector.multi_reduction <add>, %98, %cst_37 [0] : vector<8x32xf32> to vector<32xf32>
    %100 = vector.shape_cast %99 : vector<32xf32> to vector<1x32xf32>
    %cst_38 = arith.constant 1.250000e-01 : f32
    %101 = vector.broadcast %cst_38 : f32 to vector<1x32xf32>
    %102 = arith.mulf %97, %101 : vector<1x32xf32>
    %cst_39 = arith.constant 1.250000e-01 : f32
    %103 = vector.broadcast %cst_39 : f32 to vector<1x32xf32>
    %104 = arith.mulf %100, %103 : vector<1x32xf32>
    %105 = arith.mulf %102, %102 : vector<1x32xf32>
    %106 = arith.subf %104, %105 : vector<1x32xf32>
    %cst_40 = arith.constant 9.99999974E-6 : f32
    %107 = vector.broadcast %cst_40 : f32 to vector<1x32xf32>
    %108 = arith.addf %106, %107 : vector<1x32xf32>
    %109 = math.rsqrt %108 : vector<1x32xf32>
    %110 = arith.mulf %94, %109 : vector<1x32xf32>
    %111 = arith.mulf %102, %110 : vector<1x32xf32>
    %112 = arith.subf %95, %111 : vector<1x32xf32>
    %113 = vector.broadcast %110 : vector<1x32xf32> to vector<8x32xf32>
    %114 = arith.mulf %93, %113 : vector<8x32xf32>
    %115 = vector.broadcast %112 : vector<1x32xf32> to vector<8x32xf32>
    %116 = arith.addf %114, %115 : vector<8x32xf32>
    %cst_41 = arith.constant 0.000000e+00 : f32
    %117 = vector.broadcast %cst_41 : f32 to vector<8x32xf32>
    %118 = arith.maximumf %116, %117 : vector<8x32xf32>
    %119 = vector.extract_strided_slice %8 {offsets = [0, 0], sizes = [8, 32], strides = [1, 1]} : vector<8x128xf32> to vector<8x32xf32>
    %120 = vector.extract_strided_slice %34 {offsets = [0, 0], sizes = [8, 32], strides = [1, 1]} : vector<8x128xf32> to vector<8x32xf32>
    %121 = arith.addf %119, %120 : vector<8x32xf32>
    %c0_42 = arith.constant 0 : index
    %c0_43 = arith.constant 0 : index
    %122 = vector.load %arg8[%c0_42, %c0_43] : memref<8x128xf32, #tpu.memory_space<vmem>>, vector<8x32xf32>
    tpu.vector_store %arg8[%c0_42, %c0_43], %121 {strides = array<i32>} : memref<8x128xf32, #tpu.memory_space<vmem>>, vector<8x32xf32>,
    %123 = vector.extract_strided_slice %8 {offsets = [0, 32], sizes = [8, 32], strides = [1, 1]} : vector<8x128xf32> to vector<8x32xf32>
    %124 = vector.extract_strided_slice %62 {offsets = [0, 0], sizes = [8, 32], strides = [1, 1]} : vector<8x96xf32> to vector<8x32xf32>
    %125 = arith.addf %123, %124 : vector<8x32xf32>
    %c0_44 = arith.constant 0 : index
    %c32 = arith.constant 32 : index
    %126 = vector.load %arg8[%c0_44, %c32] : memref<8x128xf32, #tpu.memory_space<vmem>>, vector<8x32xf32>
    tpu.vector_store %arg8[%c0_44, %c32], %125 {strides = array<i32>} : memref<8x128xf32, #tpu.memory_space<vmem>>, vector<8x32xf32>,
    %127 = vector.extract_strided_slice %8 {offsets = [0, 64], sizes = [8, 32], strides = [1, 1]} : vector<8x128xf32> to vector<8x32xf32>
    %128 = vector.extract_strided_slice %90 {offsets = [0, 0], sizes = [8, 32], strides = [1, 1]} : vector<8x64xf32> to vector<8x32xf32>
    %129 = arith.addf %127, %128 : vector<8x32xf32>
    %c0_45 = arith.constant 0 : index
    %c64 = arith.constant 64 : index
    %130 = vector.load %arg8[%c0_45, %c64] : memref<8x128xf32, #tpu.memory_space<vmem>>, vector<8x32xf32>
    tpu.vector_store %arg8[%c0_45, %c64], %129 {strides = array<i32>} : memref<8x128xf32, #tpu.memory_space<vmem>>, vector<8x32xf32>,
    %131 = vector.extract_strided_slice %8 {offsets = [0, 96], sizes = [8, 32], strides = [1, 1]} : vector<8x128xf32> to vector<8x32xf32>
    %132 = arith.addf %131, %118 : vector<8x32xf32>
    %c0_46 = arith.constant 0 : index
    %c96 = arith.constant 96 : index
    %133 = vector.load %arg8[%c0_46, %c96] : memref<8x128xf32, #tpu.memory_space<vmem>>, vector<8x32xf32>
    tpu.vector_store %arg8[%c0_46, %c96], %132 {strides = array<i32>} : memref<8x128xf32, #tpu.memory_space<vmem>>, vector<8x32xf32>,
    return
  }
}

</mosaic_0001>

<llo_original>
// kernel: tpu_custom_call.1
$region0: #{tpu_custom_call.1}
  #allocation0 [shape = 'u32[]', space=smem, size = 0x4, offset = 0x4, fixed_abs, tag = 'smem constant byte address 0x4 - core index']
  #allocation1 [shape = 'u32[144,128]{1,0:T(1,128)}', space=vmem, size = 0x12000, scoped, tag = 'internal scratch']
  %s0 = inlined_call_operand.hbm [shape: f32[8,16], index: 0, kind: input, shape index: {}]
  %s1 = inlined_call_operand.hbm [shape: f32[16,256], index: 1, kind: input, shape index: {}]
  %s2 = inlined_call_operand.hbm [shape: f32[96,96], index: 2, kind: input, shape index: {}]
  %s3 = inlined_call_operand.hbm [shape: f32[64,64], index: 3, kind: input, shape index: {}]
  %s4 = inlined_call_operand.hbm [shape: f32[32,32], index: 4, kind: input, shape index: {}]
  %s5 = inlined_call_operand.vmem [shape: f32[1,320], index: 5, kind: input, shape index: {}]
  %s6 = inlined_call_operand.vmem [shape: f32[1,320], index: 6, kind: input, shape index: {}]
  %s7 = inlined_call_operand.vmem [shape: f32[1,128], index: 7, kind: input, shape index: {}]
  %s8 = inlined_call_operand.hbm [shape: f32[8,128], index: 8, kind: output, shape index: {}]
  %s9 = sld [smem:[#allocation0]]
  $region62: #{tpu_custom_call.1} parent=0
    _
  %s11 = ssub.s32 1, %s9
  %s12 = scalar_select 0, %s11, %s9
  $region1: #{tpu_custom_call.1} parent=0
    #allocation2 [shape = 'u8[4096]{0}', space=vmem, size = 0x1000, scoped, tag = 'input window, operand 0, single buffered']
    #allocation3 [shape = 's32[1]{0}', space=sflag, size = 0x4, scoped, tag = 'scoped memory for tpu_custom_call.1']
    #allocation4 [shape = 's32[1]{0}', space=sflag, size = 0x4, scoped, tag = 'scoped memory for tpu_custom_call.1']
    #allocation5 [shape = 'u8[16384]{0}', space=vmem, size = 0x4000, scoped, tag = 'input window, operand 1, single buffered']
    #allocation6 [shape = 's32[1]{0}', space=sflag, size = 0x4, scoped, tag = 'scoped memory for tpu_custom_call.1']
    #allocation7 [shape = 'u8[49152]{0}', space=vmem, size = 0xc000, scoped, tag = 'input window, operand 2, single buffered']
    #allocation8 [shape = 'u8[32768]{0}', space=vmem, size = 0x8000, scoped, tag = 'input window, operand 3, single buffered']
    #allocation9 [shape = 's32[1]{0}', space=sflag, size = 0x4, scoped, tag = 'scoped memory for tpu_custom_call.1']
    #allocation10 [shape = 'u8[16384]{0}', space=vmem, size = 0x4000, scoped, tag = 'input window, operand 4, single buffered']
    #allocation11 [shape = 'u8[4096]{0}', space=vmem, size = 0x1000, scoped, tag = 'output window, operand 0, single buffered']
    %13 = vsyncpa [#allocation3], 0
    %14 = vsyncpa [#allocation6], 0
    %15 = vsyncpa [#allocation9], 0
    %16 = vsyncpa [#allocation4], 0
    // Predicated region
    $region2: #{tpu_custom_call.1} parent=1 // pred_check
      _
    $region3: #{tpu_custom_call.1} parent=1 // pred_check_branch
      %18 = sbr.rel (0) target = $region5
    $region4: #{tpu_custom_call.1} parent=1 // pred_region
      %s20 = ssub.s32 128, 128
      %21 = vsyncadd [#allocation3], %s20
      %s23 = sshll.u32 [#allocation2], 4
      %s24 = int_to_ptr.vmem [resolvable:$true] %s23
      %26 = dma.hbm_to_vmem [thread:$0]  %s0, 128, %s24, [#allocation3]
    $region5: #{tpu_custom_call.1} parent=1 // pred_fallthru
      _
    // Predicated region
    $region6: #{tpu_custom_call.1} parent=1 // pred_check
      _
    $region7: #{tpu_custom_call.1} parent=1 // pred_check_branch
      %28 = sbr.rel (0) target = $region9
    $region8: #{tpu_custom_call.1} parent=1 // pred_region
      %s30 = ssub.s32 512, 512
      %31 = vsyncadd [#allocation6], %s30
      %s32 = sshll.u32 [#allocation5], 4
      %s33 = int_to_ptr.vmem [resolvable:$true] %s32
      %38 = dma.hbm_to_vmem [thread:$0]  %s1, 512, %s33, [#allocation6], 256, 256, 16
    $region9: #{tpu_custom_call.1} parent=1 // pred_fallthru
      _
    // Predicated region
    $region10: #{tpu_custom_call.1} parent=1 // pred_check
      _
    $region11: #{tpu_custom_call.1} parent=1 // pred_check_branch
      %40 = sbr.rel (0) target = $region13
    $region12: #{tpu_custom_call.1} parent=1 // pred_region
      %s42 = ssub.s32 1536, 1536
      %43 = vsyncadd [#allocation6], %s42
      %s44 = sshll.u32 [#allocation7], 4
      %s45 = int_to_ptr.vmem [resolvable:$true] %s44
      %50 = dma.hbm_to_vmem [thread:$0]  %s2, 1536, %s45, [#allocation6], 128, 128, 8
    $region13: #{tpu_custom_call.1} parent=1 // pred_fallthru
      _
    // Predicated region
    $region14: #{tpu_custom_call.1} parent=1 // pred_check
      _
    $region15: #{tpu_custom_call.1} parent=1 // pred_check_branch
      %52 = sbr.rel (0) target = $region17
    $region16: #{tpu_custom_call.1} parent=1 // pred_region
      %s54 = ssub.s32 1024, 1024
      %55 = vsyncadd [#allocation9], %s54
      %s56 = sshll.u32 [#allocation8], 4
      %s57 = int_to_ptr.vmem [resolvable:$true] %s56
      %62 = dma.hbm_to_vmem [thread:$0]  %s3, 1024, %s57, [#allocation9], 128, 128, 8
    $region17: #{tpu_custom_call.1} parent=1 // pred_fallthru
      _
    // Predicated region
    $region18: #{tpu_custom_call.1} parent=1 // pred_check
      _
    $region19: #{tpu_custom_call.1} parent=1 // pred_check_branch
      %64 = sbr.rel (0) target = $region21
    $region20: #{tpu_custom_call.1} parent=1 // pred_region
      %s66 = ssub.s32 512, 512
      %67 = vsyncadd [#allocation9], %s66
      %s68 = sshll.u32 [#allocation10], 4
      %s69 = int_to_ptr.vmem [resolvable:$true] %s68
      %74 = dma.hbm_to_vmem [thread:$0]  %s4, 512, %s69, [#allocation9], 128, 128, 8
    $region21: #{tpu_custom_call.1} parent=1 // pred_fallthru
      _
    // Predicated region
    $region22: #{tpu_custom_call.1} parent=1 // pred_check
      _
    $region23: #{tpu_custom_call.1} parent=1 // pred_check_branch
      %76 = sbr.rel (0) target = $region25
    $region24: #{tpu_custom_call.1} parent=1 // pred_region
      _
    $region25: #{tpu_custom_call.1} parent=1 // pred_fallthru
      _
    // Predicated region
    $region26: #{tpu_custom_call.1} parent=1 // pred_check
      _
    $region27: #{tpu_custom_call.1} parent=1 // pred_check_branch
      %78 = sbr.rel (0) target = $region29
    $region28: #{tpu_custom_call.1} parent=1 // pred_region
      _
    $region29: #{tpu_custom_call.1} parent=1 // pred_fallthru
      _
    // Predicated region
    $region30: #{tpu_custom_call.1} parent=1 // pred_check
      _
    $region31: #{tpu_custom_call.1} parent=1 // pred_check_branch
      %80 = sbr.rel (0) target = $region33
    $region32: #{tpu_custom_call.1} parent=1 // pred_region
      _
    $region33: #{tpu_custom_call.1} parent=1 // pred_fallthru
      _
    // Predicated region
    $region34: #{tpu_custom_call.1} parent=1 // pred_check
      _
    $region35: #{tpu_custom_call.1} parent=1 // pred_check_branch
      %82 = sbr.rel (0) target = $region37
    $region36: #{tpu_custom_call.1} parent=1 // pred_region
      %83 = dma.done [#allocation3], 128
    $region37: #{tpu_custom_call.1} parent=1 // pred_fallthru
      _
    // Predicated region
    $region38: #{tpu_custom_call.1} parent=1 // pred_check
      _
    $region39: #{tpu_custom_call.1} parent=1 // pred_check_branch
      %85 = sbr.rel (0) target = $region41
    $region40: #{tpu_custom_call.1} parent=1 // pred_region
      %86 = dma.done [#allocation6], 512
    $region41: #{tpu_custom_call.1} parent=1 // pred_fallthru
      _
    // Predicated region
    $region42: #{tpu_custom_call.1} parent=1 // pred_check
      _
    $region43: #{tpu_custom_call.1} parent=1 // pred_check_branch
      %88 = sbr.rel (0) target = $region45
    $region44: #{tpu_custom_call.1} parent=1 // pred_region
      %89 = dma.done [#allocation6], 1536
    $region45: #{tpu_custom_call.1} parent=1 // pred_fallthru
      _
    // Predicated region
    $region46: #{tpu_custom_call.1} parent=1 // pred_check
      _
    $region47: #{tpu_custom_call.1} parent=1 // pred_check_branch
      %91 = sbr.rel (0) target = $region49
    $region48: #{tpu_custom_call.1} parent=1 // pred_region
      %92 = dma.done [#allocation9], 1024
    $region49: #{tpu_custom_call.1} parent=1 // pred_fallthru
      _
    // Predicated region
    $region50: #{tpu_custom_call.1} parent=1 // pred_check
      _
    $region51: #{tpu_custom_call.1} parent=1 // pred_check_branch
      %94 = sbr.rel (0) target = $region53
    $region52: #{tpu_custom_call.1} parent=1 // pred_region
      %95 = dma.done [#allocation9], 512
    $region53: #{tpu_custom_call.1} parent=1 // pred_fallthru
      _
    %v96 = vld [vmem:[#allocation2] sm:$0xff]
    %v97 = vld [vmem:[%s5] sm:$0x7]
    %v98 = vld [vmem:[%s6] sm:$0x7]
    %v99 = vld [vmem:[#allocation5] sm:$0xff]
    %v100 = vld [vmem:[#allocation5 + $0x8] sm:$0xff]
    %v101 = vld [vmem:[#allocation5 + $0x10] sm:$0xff]
    %v102 = vld [vmem:[#allocation5 + $0x18] sm:$0xff]
    %vm103 = vcmask 130048
    %v105 = vsel %vm103, %v96, 0
    %107 = vmatprep.subr.mxu0 %v100
    %108 = vmatpush1.msra.mxu0 %v99
    %109 = vmatprep.subr.mxu0 %v102
    %110 = vmatpush1.msra.mxu0 %v101
    %111 = vmatprep.subr.mxu0 0.0
    %112 = vmatpush1.msra.mxu0 0.0
    %113 = vmatprep.subr.mxu0 0.0
    %114 = vmatpush1.msra.mxu0 0.0
    %115 = vmatprep.subr.mxu0 0.0
    %116 = vmatpush1.msra.mxu0 0.0
    %117 = vmatprep.subr.mxu0 0.0
    %118 = vmatpush1.msra.mxu0 0.0
    %119 = vmatprep.subr.mxu0 0.0
    %120 = vmatpush1.msra.mxu0 0.0
    %121 = vmatprep.subr.mxu0 0.0
    %122 = vmatpush1.msra.mxu0 0.0
    %123 = vmatprep.subr.mxu0 0.0
    %124 = vmatpush1.msra.mxu0 0.0
    %125 = vmatprep.subr.mxu0 0.0
    %126 = vmatpush1.msra.mxu0 0.0
    %127 = vmatprep.subr.mxu0 0.0
    %128 = vmatpush1.msra.mxu0 0.0
    %129 = vmatprep.subr.mxu0 0.0
    %130 = vmatpush1.msra.mxu0 0.0
    %131 = vmatprep.subr.mxu0 0.0
    %132 = vmatpush1.msra.mxu0 0.0
    %133 = vmatprep.subr.mxu0 0.0
    %134 = vmatpush1.msra.mxu0 0.0
    %135 = vmatprep.subr.mxu0 0.0
    %136 = vmatpush1.msra.mxu0 0.0
    %137 = vmatprep.subr.mxu0 0.0
    %138 = vmatpush1.msra.mxu0 0.0
    %139 = vmatprep.subr.mxu0 0.0
    %140 = vmatpush1.msra.mxu0 0.0
    %141 = vmatprep.subr.mxu0 0.0
    %142 = vmatpush1.msra.mxu0 0.0
    %143 = vmatprep.subr.mxu0 0.0
    %144 = vmatpush1.msra.mxu0 0.0
    %145 = vmatprep.subr.mxu0 0.0
    %146 = vmatpush1.msra.mxu0 0.0
    %147 = vmatprep.subr.mxu0 0.0
    %148 = vmatpush1.msra.mxu0 0.0
    %149 = vmatprep.subr.mxu0 0.0
    %150 = vmatpush1.msra.mxu0 0.0
    %151 = vmatprep.subr.mxu0 0.0
    %152 = vmatpush1.msra.mxu0 0.0
    %153 = vmatprep.subr.mxu0 0.0
    %154 = vmatpush1.msra.mxu0 0.0
    %155 = vmatprep.subr.mxu0 0.0
    %156 = vmatpush1.msra.mxu0 0.0
    %157 = vmatprep.subr.mxu0 0.0
    %158 = vmatpush1.msra.mxu0 0.0
    %159 = vmatprep.subr.mxu0 0.0
    %160 = vmatpush1.msra.mxu0 0.0
    %161 = vmatprep.subr.mxu0 0.0
    %162 = vmatpush1.msra.mxu0 0.0
    %163 = vmatprep.subr.mxu0 0.0
    %164 = vmatpush1.msra.mxu0 0.0
    %165 = vmatprep.subr.mxu0 0.0
    %166 = vmatpush1.msra.mxu0 0.0
    %167 = vmatprep.subr.mxu0 0.0
    %168 = vmatpush1.msra.mxu0 0.0
    %169 = vmatprep.subr.mxu0 0.0
    %170 = vmatpush1.msra.mxu0 0.0
    %171 = vmatprep.mubr.f32.mxu0 0.0
    %172 = vmatmul.mubr.f32.gmra.mrb[0].mxu0 %v105
    %v173 = vpop.f32.mrb[0].mxu0
    %v174 = vadd.f32 0.0, %v173
    %v175 = vpop.f32.mrb[0].mxu0
    %v176 = vadd.f32 0.0, %v175
    %177 = vdwg.mxu0
    %v178 = vld [vmem:[%s7] sm:$0x1]
    %v180 = vlaneseq
    %v181 = vshrl.u32 %v180, 7
    %v182 = vsub.s32 0, %v181
    %v183 = vrot.slane %v178, %v182
    %v185 = vadd.f32 %v176, %v183
    %v186 = vrot.slane %v174, 4
    %v187 = vadd.f32 %v174, %v186
    %v188 = vrot.slane %v187, 2
    %v189 = vadd.f32 %v187, %v188
    %v190 = vrot.slane %v189, 1
    %v191 = vadd.f32 %v189, %v190
    %v192 = vmul.f32 %v174, %v174
    %v193 = vrot.slane %v192, 4
    %v194 = vadd.f32 %v192, %v193
    %v195 = vrot.slane %v194, 2
    %v196 = vadd.f32 %v194, %v195
    %v197 = vrot.slane %v196, 1
    %v198 = vadd.f32 %v196, %v197
    %v199 = vmul.f32 %v191, 0.125
    %v200 = vmul.f32 %v198, 0.125
    %v201 = vmul.f32 %v199, %v199
    %v202 = vsub.f32 %v200, %v201
    %v203 = vadd.f32 %v202, 1e-05
    %v204 = vrsqrt.pop %v203
    %v205 = vmul.f32 %v97, %v204
    %v206 = vmul.f32 %v199, %v205
    %v207 = vsub.f32 %v98, %v206
    %v209 = vlaneseq
    %v210 = vshrl.u32 %v209, 7
    %v211 = vsub.s32 0, %v210
    %v212 = vrot.slane %v205, %v211
    %v214 = vmul.f32 %v174, %v212
    %v216 = vlaneseq
    %v217 = vshrl.u32 %v216, 7
    %v218 = vsub.s32 0, %v217
    %v219 = vrot.slane %v207, %v218
    %v221 = vadd.f32 %v214, %v219
    %v222 = vmax.f32 %v221, 0.0
    %v223 = vld [vmem:[#allocation7] sm:$0xff]
    %v224 = vld [vmem:[#allocation7 + $0x8] sm:$0xff]
    %v225 = vld [vmem:[#allocation7 + $0x10] sm:$0xff]
    %v226 = vld [vmem:[#allocation7 + $0x18] sm:$0xff]
    %v227 = vld [vmem:[#allocation7 + $0x20] sm:$0xff]
    %v228 = vld [vmem:[#allocation7 + $0x28] sm:$0xff]
    %v229 = vld [vmem:[#allocation7 + $0x30] sm:$0xff]
    %v230 = vld [vmem:[#allocation7 + $0x38] sm:$0xff]
    %v231 = vld [vmem:[#allocation7 + $0x40] sm:$0xff]
    %v232 = vld [vmem:[#allocation7 + $0x48] sm:$0xff]
    %v233 = vld [vmem:[#allocation7 + $0x50] sm:$0xff]
    %v234 = vld [vmem:[#allocation7 + $0x58] sm:$0xff]
    %236 = vrot.lane.b32.xlu0 %v222, 96
    %v237 = vpop.permute.xlu0 %236
    %vm238 = vcmask 785408
    %v239 = vsel %vm238, %v237, 0
    %241 = vmatprep.subr.mxu0 0.0
    %242 = vmatpush1.msra.mxu0 %v223
    %243 = vmatprep.subr.mxu0 0.0
    %244 = vmatpush1.msra.mxu0 %v224
    %245 = vmatprep.subr.mxu0 0.0
    %246 = vmatpush1.msra.mxu0 %v225
    %247 = vmatprep.subr.mxu0 0.0
    %248 = vmatpush1.msra.mxu0 %v226
    %249 = vmatprep.subr.mxu0 0.0
    %250 = vmatpush1.msra.mxu0 %v227
    %251 = vmatprep.subr.mxu0 0.0
    %252 = vmatpush1.msra.mxu0 %v228
    %253 = vmatprep.subr.mxu0 0.0
    %254 = vmatpush1.msra.mxu0 %v229
    %255 = vmatprep.subr.mxu0 0.0
    %256 = vmatpush1.msra.mxu0 %v230
    %257 = vmatprep.subr.mxu0 0.0
    %258 = vmatpush1.msra.mxu0 %v231
    %259 = vmatprep.subr.mxu0 0.0
    %260 = vmatpush1.msra.mxu0 %v232
    %261 = vmatprep.subr.mxu0 0.0
    %262 = vmatpush1.msra.mxu0 %v233
    %263 = vmatprep.subr.mxu0 0.0
    %264 = vmatpush1.msra.mxu0 %v234
    %265 = vmatprep.subr.mxu0 0.0
    %266 = vmatpush1.msra.mxu0 0.0
    %267 = vmatprep.subr.mxu0 0.0
    %268 = vmatpush1.msra.mxu0 0.0
    %269 = vmatprep.subr.mxu0 0.0
    %270 = vmatpush1.msra.mxu0 0.0
    %271 = vmatprep.subr.mxu0 0.0
    %272 = vmatpush1.msra.mxu0 0.0
    %273 = vmatprep.subr.mxu0 0.0
    %274 = vmatpush1.msra.mxu0 0.0
    %275 = vmatprep.subr.mxu0 0.0
    %276 = vmatpush1.msra.mxu0 0.0
    %277 = vmatprep.subr.mxu0 0.0
    %278 = vmatpush1.msra.mxu0 0.0
    %279 = vmatprep.subr.mxu0 0.0
    %280 = vmatpush1.msra.mxu0 0.0
    %281 = vmatprep.subr.mxu0 0.0
    %282 = vmatpush1.msra.mxu0 0.0
    %283 = vmatprep.subr.mxu0 0.0
    %284 = vmatpush1.msra.mxu0 0.0
    %285 = vmatprep.subr.mxu0 0.0
    %286 = vmatpush1.msra.mxu0 0.0
    %287 = vmatprep.subr.mxu0 0.0
    %288 = vmatpush1.msra.mxu0 0.0
    %289 = vmatprep.subr.mxu0 0.0
    %290 = vmatpush1.msra.mxu0 0.0
    %291 = vmatprep.subr.mxu0 0.0
    %292 = vmatpush1.msra.mxu0 0.0
    %293 = vmatprep.subr.mxu0 0.0
    %294 = vmatpush1.msra.mxu0 0.0
    %295 = vmatprep.subr.mxu0 0.0
    %296 = vmatpush1.msra.mxu0 0.0
    %297 = vmatprep.subr.mxu0 0.0
    %298 = vmatpush1.msra.mxu0 0.0
    %299 = vmatprep.subr.mxu0 0.0
    %300 = vmatpush1.msra.mxu0 0.0
    %301 = vmatprep.subr.mxu0 0.0
    %302 = vmatpush1.msra.mxu0 0.0
    %303 = vmatprep.subr.mxu0 0.0
    %304 = vmatpush1.msra.mxu0 0.0
    %305 = vmatprep.mubr.f32.mxu0 0.0
    %306 = vmatmul.mubr.f32.gmra.mrb[0].mxu0 %v239
    %v307 = vpop.f32.mrb[0].mxu0
    %v308 = vadd.f32 0.0, %v307
    %v309 = vpop.f32.mrb[0].mxu0
    %310 = vdwg.mxu0
    %v311 = vsel %vm238, %v308, 0.0
    %v312 = vrot.slane %v311, 4
    %v313 = vadd.f32 %v311, %v312
    %v314 = vrot.slane %v313, 2
    %v315 = vadd.f32 %v313, %v314
    %v316 = vrot.slane %v315, 1
    %v317 = vadd.f32 %v315, %v316
    %v318 = vmul.f32 %v308, %v308
    %v319 = vsel %vm238, %v318, 0.0
    %v320 = vrot.slane %v319, 4
    %v321 = vadd.f32 %v319, %v320
    %v322 = vrot.slane %v321, 2
    %v323 = vadd.f32 %v321, %v322
    %v324 = vrot.slane %v323, 1
    %v325 = vadd.f32 %v323, %v324
    %v326 = vmul.f32 %v317, 0.125
    %v327 = vmul.f32 %v325, 0.125
    %v328 = vmul.f32 %v326, %v326
    %v329 = vsub.f32 %v327, %v328
    %v330 = vadd.f32 %v329, 1e-05
    %v331 = vrsqrt.pop %v330
    %v333 = vrot.slane %v97, 1
    %v335 = vmul.f32 %v333, %v331
    %v336 = vmul.f32 %v326, %v335
    %v338 = vrot.slane %v98, 1
    %v340 = vsub.f32 %v338, %v336
    %v342 = vlaneseq
    %v343 = vshrl.u32 %v342, 7
    %v344 = vsub.s32 0, %v343
    %v345 = vrot.slane %v335, %v344
    %v347 = vmul.f32 %v308, %v345
    %v349 = vlaneseq
    %v350 = vshrl.u32 %v349, 7
    %v351 = vsub.s32 0, %v350
    %v352 = vrot.slane %v340, %v351
    %v354 = vadd.f32 %v347, %v352
    %v355 = vmax.f32 %v354, 0.0
    %v356 = vld [vmem:[#allocation8] sm:$0xff]
    %v357 = vld [vmem:[#allocation8 + $0x8] sm:$0xff]
    %v358 = vld [vmem:[#allocation8 + $0x10] sm:$0xff]
    %v359 = vld [vmem:[#allocation8 + $0x18] sm:$0xff]
    %v360 = vld [vmem:[#allocation8 + $0x20] sm:$0xff]
    %v361 = vld [vmem:[#allocation8 + $0x28] sm:$0xff]
    %v362 = vld [vmem:[#allocation8 + $0x30] sm:$0xff]
    %v363 = vld [vmem:[#allocation8 + $0x38] sm:$0xff]
    %365 = vrot.lane.b32.xlu0 %v355, 96
    %v366 = vpop.permute.xlu0 %365
    %vm367 = vcmask 523264
    %v368 = vsel %vm367, %v366, 0
    %370 = vmatprep.subr.mxu0 0.0
    %371 = vmatpush1.msra.mxu0 %v356
    %372 = vmatprep.subr.mxu0 0.0
    %373 = vmatpush1.msra.mxu0 %v357
    %374 = vmatprep.subr.mxu0 0.0
    %375 = vmatpush1.msra.mxu0 %v358
    %376 = vmatprep.subr.mxu0 0.0
    %377 = vmatpush1.msra.mxu0 %v359
    %378 = vmatprep.subr.mxu0 0.0
    %379 = vmatpush1.msra.mxu0 %v360
    %380 = vmatprep.subr.mxu0 0.0
    %381 = vmatpush1.msra.mxu0 %v361
    %382 = vmatprep.subr.mxu0 0.0
    %383 = vmatpush1.msra.mxu0 %v362
    %384 = vmatprep.subr.mxu0 0.0
    %385 = vmatpush1.msra.mxu0 %v363
    %386 = vmatprep.subr.mxu0 0.0
    %387 = vmatpush1.msra.mxu0 0.0
    %388 = vmatprep.subr.mxu0 0.0
    %389 = vmatpush1.msra.mxu0 0.0
    %390 = vmatprep.subr.mxu0 0.0
    %391 = vmatpush1.msra.mxu0 0.0
    %392 = vmatprep.subr.mxu0 0.0
    %393 = vmatpush1.msra.mxu0 0.0
    %394 = vmatprep.subr.mxu0 0.0
    %395 = vmatpush1.msra.mxu0 0.0
    %396 = vmatprep.subr.mxu0 0.0
    %397 = vmatpush1.msra.mxu0 0.0
    %398 = vmatprep.subr.mxu0 0.0
    %399 = vmatpush1.msra.mxu0 0.0
    %400 = vmatprep.subr.mxu0 0.0
    %401 = vmatpush1.msra.mxu0 0.0
    %402 = vmatprep.subr.mxu0 0.0
    %403 = vmatpush1.msra.mxu0 0.0
    %404 = vmatprep.subr.mxu0 0.0
    %405 = vmatpush1.msra.mxu0 0.0
    %406 = vmatprep.subr.mxu0 0.0
    %407 = vmatpush1.msra.mxu0 0.0
    %408 = vmatprep.subr.mxu0 0.0
    %409 = vmatpush1.msra.mxu0 0.0
    %410 = vmatprep.subr.mxu0 0.0
    %411 = vmatpush1.msra.mxu0 0.0
    %412 = vmatprep.subr.mxu0 0.0
    %413 = vmatpush1.msra.mxu0 0.0
    %414 = vmatprep.subr.mxu0 0.0
    %415 = vmatpush1.msra.mxu0 0.0
    %416 = vmatprep.subr.mxu0 0.0
    %417 = vmatpush1.msra.mxu0 0.0
    %418 = vmatprep.subr.mxu0 0.0
    %419 = vmatpush1.msra.mxu0 0.0
    %420 = vmatprep.subr.mxu0 0.0
    %421 = vmatpush1.msra.mxu0 0.0
    %422 = vmatprep.subr.mxu0 0.0
    %423 = vmatpush1.msra.mxu0 0.0
    %424 = vmatprep.subr.mxu0 0.0
    %425 = vmatpush1.msra.mxu0 0.0
    %426 = vmatprep.subr.mxu0 0.0
    %427 = vmatpush1.msra.mxu0 0.0
    %428 = vmatprep.subr.mxu0 0.0
    %429 = vmatpush1.msra.mxu0 0.0
    %430 = vmatprep.subr.mxu0 0.0
    %431 = vmatpush1.msra.mxu0 0.0
    %432 = vmatprep.subr.mxu0 0.0
    %433 = vmatpush1.msra.mxu0 0.0
    %434 = vmatprep.mubr.f32.mxu0 0.0
    %435 = vmatmul.mubr.f32.gmra.mrb[0].mxu0 %v368
    %v436 = vpop.f32.mrb[0].mxu0
    %v437 = vadd.f32 0.0, %v436
    %v438 = vpop.f32.mrb[0].mxu0
    %439 = vdwg.mxu0
    %v440 = vsel %vm367, %v437, 0.0
    %v441 = vrot.slane %v440, 4
    %v442 = vadd.f32 %v440, %v441
    %v443 = vrot.slane %v442, 2
    %v444 = vadd.f32 %v442, %v443
    %v445 = vrot.slane %v444, 1
    %v446 = vadd.f32 %v444, %v445
    %v447 = vmul.f32 %v437, %v437
    %v448 = vsel %vm367, %v447, 0.0
    %v449 = vrot.slane %v448, 4
    %v450 = vadd.f32 %v448, %v449
    %v451 = vrot.slane %v450, 2
    %v452 = vadd.f32 %v450, %v451
    %v453 = vrot.slane %v452, 1
    %v454 = vadd.f32 %v452, %v453
    %v455 = vmul.f32 %v446, 0.125
    %v456 = vmul.f32 %v454, 0.125
    %v457 = vmul.f32 %v455, %v455
    %v458 = vsub.f32 %v456, %v457
    %v459 = vadd.f32 %v458, 1e-05
    %v460 = vrsqrt.pop %v459
    %461 = vrot.lane.b32.xlu0 %v97, 32
    %v462 = vpop.permute.xlu0 %461
    %v463 = vrot.slane %v462, 1
    %v464 = vrot.slane %v462, 2
    %vm465 = vcmask 261120
    %v466 = vsel %vm465, %v463, %v464
    %v468 = vmul.f32 %v466, %v460
    %v469 = vmul.f32 %v455, %v468
    %470 = vrot.lane.b32.xlu0 %v98, 32
    %v471 = vpop.permute.xlu0 %470
    %v472 = vrot.slane %v471, 1
    %v473 = vrot.slane %v471, 2
    %v474 = vsel %vm465, %v472, %v473
    %v476 = vsub.f32 %v474, %v469
    %v478 = vlaneseq
    %v479 = vshrl.u32 %v478, 7
    %v480 = vsub.s32 0, %v479
    %v481 = vrot.slane %v468, %v480
    %v483 = vmul.f32 %v437, %v481
    %v485 = vlaneseq
    %v486 = vshrl.u32 %v485, 7
    %v487 = vsub.s32 0, %v486
    %v488 = vrot.slane %v476, %v487
    %v490 = vadd.f32 %v483, %v488
    %v491 = vmax.f32 %v490, 0.0
    %v492 = vld [vmem:[#allocation10] sm:$0xff]
    %v493 = vld [vmem:[#allocation10 + $0x8] sm:$0xff]
    %v494 = vld [vmem:[#allocation10 + $0x10] sm:$0xff]
    %v495 = vld [vmem:[#allocation10 + $0x18] sm:$0xff]
    %497 = vrot.lane.b32.xlu0 %v491, 96
    %v498 = vpop.permute.xlu0 %497
    %v499 = vsel %vm465, %v498, 0
    %501 = vmatprep.subr.mxu0 0.0
    %502 = vmatpush1.msra.mxu0 %v492
    %503 = vmatprep.subr.mxu0 0.0
    %504 = vmatpush1.msra.mxu0 %v493
    %505 = vmatprep.subr.mxu0 0.0
    %506 = vmatpush1.msra.mxu0 %v494
    %507 = vmatprep.subr.mxu0 0.0
    %508 = vmatpush1.msra.mxu0 %v495
    %509 = vmatprep.subr.mxu0 0.0
    %510 = vmatpush1.msra.mxu0 0.0
    %511 = vmatprep.subr.mxu0 0.0
    %512 = vmatpush1.msra.mxu0 0.0
    %513 = vmatprep.subr.mxu0 0.0
    %514 = vmatpush1.msra.mxu0 0.0
    %515 = vmatprep.subr.mxu0 0.0
    %516 = vmatpush1.msra.mxu0 0.0
    %517 = vmatprep.subr.mxu0 0.0
    %518 = vmatpush1.msra.mxu0 0.0
    %519 = vmatprep.subr.mxu0 0.0
    %520 = vmatpush1.msra.mxu0 0.0
    %521 = vmatprep.subr.mxu0 0.0
    %522 = vmatpush1.msra.mxu0 0.0
    %523 = vmatprep.subr.mxu0 0.0
    %524 = vmatpush1.msra.mxu0 0.0
    %525 = vmatprep.subr.mxu0 0.0
    %526 = vmatpush1.msra.mxu0 0.0
    %527 = vmatprep.subr.mxu0 0.0
    %528 = vmatpush1.msra.mxu0 0.0
    %529 = vmatprep.subr.mxu0 0.0
    %530 = vmatpush1.msra.mxu0 0.0
    %531 = vmatprep.subr.mxu0 0.0
    %532 = vmatpush1.msra.mxu0 0.0
    %533 = vmatprep.subr.mxu0 0.0
    %534 = vmatpush1.msra.mxu0 0.0
    %535 = vmatprep.subr.mxu0 0.0
    %536 = vmatpush1.msra.mxu0 0.0
    %537 = vmatprep.subr.mxu0 0.0
    %538 = vmatpush1.msra.mxu0 0.0
    %539 = vmatprep.subr.mxu0 0.0
    %540 = vmatpush1.msra.mxu0 0.0
    %541 = vmatprep.subr.mxu0 0.0
    %542 = vmatpush1.msra.mxu0 0.0
    %543 = vmatprep.subr.mxu0 0.0
    %544 = vmatpush1.msra.mxu0 0.0
    %545 = vmatprep.subr.mxu0 0.0
    %546 = vmatpush1.msra.mxu0 0.0
    %547 = vmatprep.subr.mxu0 0.0
    %548 = vmatpush1.msra.mxu0 0.0
    %549 = vmatprep.subr.mxu0 0.0
    %550 = vmatpush1.msra.mxu0 0.0
    %551 = vmatprep.subr.mxu0 0.0
    %552 = vmatpush1.msra.mxu0 0.0
    %553 = vmatprep.subr.mxu0 0.0
    %554 = vmatpush1.msra.mxu0 0.0
    %555 = vmatprep.subr.mxu0 0.0
    %556 = vmatpush1.msra.mxu0 0.0
    %557 = vmatprep.subr.mxu0 0.0
    %558 = vmatpush1.msra.mxu0 0.0
    %559 = vmatprep.subr.mxu0 0.0
    %560 = vmatpush1.msra.mxu0 0.0
    %561 = vmatprep.subr.mxu0 0.0
    %562 = vmatpush1.msra.mxu0 0.0
    %563 = vmatprep.subr.mxu0 0.0
    %564 = vmatpush1.msra.mxu0 0.0
    %565 = vmatprep.mubr.f32.mxu0 0.0
    %566 = vmatmul.mubr.f32.gmra.mrb[0].mxu0 %v499
    %v567 = vpop.f32.mrb[0].mxu0
    %v568 = vadd.f32 0.0, %v567
    %v569 = vpop.f32.mrb[0].mxu0
    %570 = vdwg.mxu0
    %v571 = vsel %vm465, %v568, 0.0
    %v572 = vrot.slane %v571, 4
    %v573 = vadd.f32 %v571, %v572
    %v574 = vrot.slane %v573, 2
    %v575 = vadd.f32 %v573, %v574
    %v576 = vrot.slane %v575, 1
    %v577 = vadd.f32 %v575, %v576
    %v578 = vmul.f32 %v568, %v568
    %v579 = vsel %vm465, %v578, 0.0
    %v580 = vrot.slane %v579, 4
    %v581 = vadd.f32 %v579, %v580
    %v582 = vrot.slane %v581, 2
    %v583 = vadd.f32 %v581, %v582
    %v584 = vrot.slane %v583, 1
    %v585 = vadd.f32 %v583, %v584
    %v586 = vmul.f32 %v577, 0.125
    %v587 = vmul.f32 %v585, 0.125
    %v588 = vmul.f32 %v586, %v586
    %v589 = vsub.f32 %v587, %v588
    %v590 = vadd.f32 %v589, 1e-05
    %v591 = vrsqrt.pop %v590
    %592 = vrot.lane.b32.xlu0 %v97, 96
    %v593 = vpop.permute.xlu0 %592
    %v594 = vrot.slane %v593, 2
    %v596 = vmul.f32 %v594, %v591
    %v597 = vmul.f32 %v586, %v596
    %598 = vrot.lane.b32.xlu0 %v98, 96
    %v599 = vpop.permute.xlu0 %598
    %v600 = vrot.slane %v599, 2
    %v602 = vsub.f32 %v600, %v597
    %v604 = vlaneseq
    %v605 = vshrl.u32 %v604, 7
    %v606 = vsub.s32 0, %v605
    %v607 = vrot.slane %v596, %v606
    %v609 = vmul.f32 %v568, %v607
    %v611 = vlaneseq
    %v612 = vshrl.u32 %v611, 7
    %v613 = vsub.s32 0, %v612
    %v614 = vrot.slane %v602, %v613
    %v616 = vadd.f32 %v609, %v614
    %v617 = vmax.f32 %v616, 0.0
    %v618 = vadd.f32 %v185, %v222
    %619 = vst.msk [vmem:[#allocation11] sm:$0xff] %vm465, %v618
    %620 = vrot.lane.b32.xlu0 %v355, 32
    %v621 = vpop.permute.xlu0 %620
    %v623 = vadd.f32 %v185, %v621
    %vm624 = vcmask 523520
    %625 = vst.msk [vmem:[#allocation11] sm:$0xff] %vm624, %v623
    %626 = vrot.lane.b32.xlu0 %v491, 64
    %v627 = vpop.permute.xlu0 %626
    %v629 = vadd.f32 %v185, %v627
    %vm630 = vcmask 785920
    %631 = vst.msk [vmem:[#allocation11] sm:$0xff] %vm630, %v629
    %633 = vrot.lane.b32.xlu0 %v617, 96
    %v634 = vpop.permute.xlu0 %633
    %v636 = vadd.f32 %v185, %v634
    %vm637 = vcmask 1048320
    %638 = vst.msk [vmem:[#allocation11] sm:$0xff] %vm637, %v636
    // Predicated region
    $region54: #{tpu_custom_call.1} parent=1 // pred_check
      _
    $region55: #{tpu_custom_call.1} parent=1 // pred_check_branch
      %640 = sbr.rel (0) target = $region57
    $region56: #{tpu_custom_call.1} parent=1 // pred_region
      %s642 = ssub.s32 128, 128
      %643 = vsyncadd [#allocation4], %s642
      %s645 = sshll.u32 [#allocation11], 4
      %s646 = int_to_ptr.vmem [resolvable:$true] %s645
      %648 = dma.vmem_to_hbm [thread:$0]  %s646, 128, %s8, [#allocation4]
    $region57: #{tpu_custom_call.1} parent=1 // pred_fallthru
      _
    // Predicated region
    $region58: #{tpu_custom_call.1} parent=1 // pred_check
      _
    $region59: #{tpu_custom_call.1} parent=1 // pred_check_branch
      %650 = sbr.rel (0) target = $region61
    $region60: #{tpu_custom_call.1} parent=1 // pred_region
      %651 = dma.done [#allocation4], 128
    $region61: #{tpu_custom_call.1} parent=1 // pred_fallthru
      _
    %652 = vsyncpa [#allocation3], 1
    %653 = vsyncpa [#allocation6], 1
    %654 = vsyncpa [#allocation9], 1
    %655 = vsyncpa [#allocation4], 1

</llo_original>
